<compile_context>
chip_gen: v6e
topology: v6e:2x2x1
jax: 0.10.0
libtpu: 0.0.40
codegen_flags: <defaults>
</compile_context>

<pallas_src>
import functools

import jax
import jax.numpy as jnp
from jax.experimental import pallas as pl
from jax.experimental.pallas import tpu as pltpu


def _round_up(x, m):
    return (x + m - 1) // m * m


def _fusion_linear_kernel(sel_start, fo_p,
                          x_ref, w1_ref, b1_ref, w2_ref, b2_ref,
                          act_ref, y_ref):
    # mlp_head: one full-K, N = 2*fo_p dot per batch tile; bias folded in.
    y = jnp.dot(x_ref[...], w1_ref[...], preferred_element_type=jnp.float32)
    y = y + b1_ref[...].astype(jnp.float32)
    y_ref[...] = y.astype(y_ref.dtype)

    # fc on the task-selected half: static, 128-lane-aligned slice (fo_p is a
    # multiple of 128), deliberately cast to the W2 dtype before the MXU.
    h = y[:, sel_start:sel_start + fo_p]
    act = jnp.dot(h.astype(w2_ref.dtype), w2_ref[...],
                  preferred_element_type=jnp.float32)
    act_ref[...] = (act + b2_ref[...].astype(jnp.float32)).astype(act_ref.dtype)


def prepare_fusion_params(params):
    """One-time weight padding / layout prep (hoisted out of the per-call path).

    The pre and fut halves of W1/b1 are placed at 128-lane-aligned column
    offsets 0 and fo_p of a merged (K_p, 2*fo_p) weight so the kernel can take
    the selected half with an aligned static slice."""
    w1, b1, w2, b2 = params["w1"], params["b1"], params["w2"], params["b2"]
    K, two_fo = w1.shape
    feat_out, num_class = w2.shape
    assert two_fo == 2 * feat_out, "mlp_head out_features must be 2*feat_out"

    K_p = _round_up(K, 128)
    fo_p = _round_up(feat_out, 128)
    nc_p = _round_up(num_class, 128)

    w1_p = jnp.zeros((K_p, 2 * fo_p), w1.dtype)
    w1_p = w1_p.at[:K, :feat_out].set(w1[:, :feat_out])
    w1_p = w1_p.at[:K, fo_p:fo_p + feat_out].set(w1[:, feat_out:])

    b1_p = jnp.zeros((1, 2 * fo_p), b1.dtype)
    b1_p = b1_p.at[:, :feat_out].set(b1[:, :feat_out])
    b1_p = b1_p.at[:, fo_p:fo_p + feat_out].set(b1[:, feat_out:])

    w2_p = jnp.pad(w2, ((0, fo_p - feat_out), (0, nc_p - num_class)))
    b2_p = jnp.pad(b2, ((0, 0), (0, nc_p - num_class)))

    return {
        "w1": w1_p, "b1": b1_p, "w2": w2_p, "b2": b2_p,
        "K": K, "feat_out": feat_out, "num_class": num_class,
        "K_p": K_p, "fo_p": fo_p, "nc_p": nc_p,
    }


def fusion_linear_forward(modality_feats, prepared, task, *, tm_max=256):
    """Mirrors FusionLinear.forward(modality_feats, task) -> (action, hpre, hfut).

    `prepared` comes from prepare_fusion_params(params)."""
    b, n, d = modality_feats.shape
    K = prepared["K"]
    assert n * d == K, "n*d must equal hidden*4 (mlp_head in_features)"
    K_p, fo_p, nc_p = prepared["K_p"], prepared["fo_p"], prepared["nc_p"]
    feat_out, num_class = prepared["feat_out"], prepared["num_class"]
    w1_p, b1_p, w2_p, b2_p = (prepared["w1"], prepared["b1"],
                              prepared["w2"], prepared["b2"])

    x = modality_feats.reshape(b, K)
    out_dtype = x.dtype
    itm = jnp.dtype(x.dtype).itemsize
    out_itm = jnp.dtype(out_dtype).itemsize
    w_itm = jnp.dtype(w1_p.dtype).itemsize

    # Sublane-pack width of the activation dtype -> unmasked stores.
    sub = {1: 32, 2: 16}.get(itm, 8)

    # ---- generation-aware VMEM budget (v5e/v6e: 128 MiB, v7x: 64 MiB) -------
    try:
        vmem_cap = int(pltpu.get_tpu_info().vmem_capacity_bytes)
    except Exception:
        vmem_cap = 64 * 1024 * 1024
    budget = int(0.85 * vmem_cap)

    def vmem_estimate(tm_):
        # Resident (constant index_map) weights/biases: 2 buffers each.
        resident = 2 * (K_p * 2 * fo_p + fo_p * nc_p + 8 * (2 * fo_p + nc_p)) * w_itm
        # Streamed x tile and the two double-buffered output tiles.
        streamed = 2 * tm_ * K_p * itm + 2 * tm_ * (2 * fo_p + nc_p) * out_itm
        # Live f32 intermediates (y and action) inside the body.
        live_f32 = tm_ * (2 * fo_p + nc_p) * 4
        return resident + streamed + live_f32

    # ---- batch-tile selection -----------------------------------------------
    b_r = _round_up(b, sub)
    tm = min(tm_max, b_r)
    if b_r >= 2 * sub:
        # Keep the "parallel" M axis at >= 2 tiles so both v7x TCs get work.
        tm = min(tm, _round_up((b_r + 1) // 2, sub))
    while tm > sub and vmem_estimate(tm) > budget:
        tm = _round_up(max(sub, tm // 2), sub)
    # TODO(synk): if the resident W1/W2 alone ever exceed the VMEM budget
    # (possible only for f32 weights far larger than FusionLinear's), a
    # K-tiled 2-D grid with accumulators would be needed; not implemented.
    b_p = _round_up(b, tm)
    n_m = b_p // tm

    # Only x is padded per call; the weights were prepared once.
    x_p = jnp.pad(x, ((0, b_p - b), (0, K_p - K)))

    vmem_limit = int(min(0.9 * vmem_cap,
                         max(32 * 1024 * 1024, 1.2 * vmem_estimate(tm))))
    cost = pl.CostEstimate(
        flops=int(2 * b_p * K_p * 2 * fo_p + 2 * b_p * fo_p * nc_p),
        transcendentals=0,
        bytes_accessed=int(x_p.size * itm
                           + (w1_p.size + b1_p.size + w2_p.size + b2_p.size) * w_itm
                           + b_p * (2 * fo_p + nc_p) * out_itm),
    )

    sel_start = 0 if task == "pre" else fo_p    # static (Python-level) branch
    kernel = functools.partial(_fusion_linear_kernel, sel_start, fo_p)

    grid_spec = pltpu.PrefetchScalarGridSpec(
        num_scalar_prefetch=0,
        grid=(n_m,),
        in_specs=[
            pl.BlockSpec((tm, K_p), lambda i: (i, 0)),         # x tile (streams)
            pl.BlockSpec((K_p, 2 * fo_p), lambda i: (0, 0)),   # W1 (resident, read once)
            pl.BlockSpec((1, 2 * fo_p), lambda i: (0, 0)),     # b1 (resident)
            pl.BlockSpec((fo_p, nc_p), lambda i: (0, 0)),      # W2 (resident)
            pl.BlockSpec((1, nc_p), lambda i: (0, 0)),         # b2 (resident)
        ],
        out_specs=(
            pl.BlockSpec((tm, nc_p), lambda i: (i, 0)),        # action
            pl.BlockSpec((tm, 2 * fo_p), lambda i: (i, 0)),    # merged [hpre | hfut]
        ),
    )

    action_p, y_p = pl.pallas_call(
        kernel,
        out_shape=(
            jax.ShapeDtypeStruct((b_p, nc_p), out_dtype),
            jax.ShapeDtypeStruct((b_p, 2 * fo_p), out_dtype),
        ),
        grid_spec=grid_spec,
        compiler_params=pltpu.CompilerParams(
            dimension_semantics=("parallel",),
            vmem_limit_bytes=vmem_limit,
        ),
        cost_estimate=cost,
    )(x_p, w1_p, b1_p, w2_p, b2_p)

    # Strip padding and split the merged y into hpre / hfut.
    action = action_p[:b, :num_class]
    hpre = y_p[:b, :feat_out]
    hfut = y_p[:b, fo_p:fo_p + feat_out]
    return action, hpre, hfut


def init_params(key, hidden, feat_out, num_class, dtype=jnp.float32):
    """PyTorch nn.Linear default init U(-1/sqrt(fan_in), +1/sqrt(fan_in)).

    Weights stored as (in_features, out_features)."""
    k1, k2, k3, k4 = jax.random.split(key, 4)
    in1, out1 = hidden * 4, feat_out * 2
    in2, out2 = feat_out, num_class
    lim1 = 1.0 / float(in1) ** 0.5
    lim2 = 1.0 / float(in2) ** 0.5
    return {
        "w1": jax.random.uniform(k1, (in1, out1), dtype, -lim1, lim1),
        "b1": jax.random.uniform(k2, (1, out1), dtype, -lim1, lim1),
        "w2": jax.random.uniform(k3, (in2, out2), dtype, -lim2, lim2),
        "b2": jax.random.uniform(k4, (1, out2), dtype, -lim2, lim2),
    }


def _reference_forward(modality_feats, params, task):
    b, n, d = modality_feats.shape
    x = modality_feats.reshape(b, n * d)
    y = x @ params["w1"] + params["b1"]
    feat_out = params["w2"].shape[0]
    hpre, hfut = y[:, :feat_out], y[:, feat_out:]
    h = hpre if task == "pre" else hfut
    action = h @ params["w2"] + params["b2"]
    return action, hpre, hfut


if __name__ == "__main__":
    # Small shapes consistent with the module: d == hidden, n == 4 so n*d == hidden*4.
    batch, n, hidden = 4, 4, 32
    feat_out, num_class = 128, 256

    key = jax.random.PRNGKey(0)
    k_x, k_p = jax.random.split(key)
    modality_feats = jax.random.normal(k_x, (batch, n, hidden), jnp.float32)
    params = init_params(k_p, hidden, feat_out, num_class)
    prepared = prepare_fusion_params(params)      # one-time weight padding/layout

    for task in ("pre", "fut"):
        action, hpre, hfut = fusion_linear_forward(modality_feats, prepared, task)
        jax.block_until_ready((action, hpre, hfut))
        a_ref, p_ref, f_ref = _reference_forward(modality_feats, params, task)
        assert action.shape == (batch, num_class)
        assert hpre.shape == (batch, feat_out) and hfut.shape == (batch, feat_out)
        assert jnp.allclose(action, a_ref, atol=1e-4, rtol=1e-4)
        assert jnp.allclose(hpre, p_ref, atol=1e-4, rtol=1e-4)
        assert jnp.allclose(hfut, f_ref, atol=1e-4, rtol=1e-4)

    # Non-aligned shapes: odd batch (exercises >= 2 M tiles / megacore split)
    # and feat_out / num_class that are not multiples of 128 (exercises the
    # lane-aligned merged-W1 layout and output padding).
    batch2, feat_out2, num_class2 = 37, 96, 200
    params2 = init_params(k_p, hidden, feat_out2, num_class2)
    prepared2 = prepare_fusion_params(params2)
    feats2 = jax.random.normal(k_x, (batch2, n, hidden), jnp.float32)
    a2, p2, f2 = fusion_linear_forward(feats2, prepared2, "fut")
    jax.block_until_ready((a2, p2, f2))
    a2r, p2r, f2r = _reference_forward(feats2, params2, "fut")
    assert a2.shape == (batch2, num_class2)
    assert p2.shape == (batch2, feat_out2) and f2.shape == (batch2, feat_out2)
    assert jnp.allclose(a2, a2r, atol=1e-4, rtol=1e-4)
    assert jnp.allclose(p2, p2r, atol=1e-4, rtol=1e-4)
    assert jnp.allclose(f2, f2r, atol=1e-4, rtol=1e-4)

    print("KERNEL_OK")
</pallas_src>

<mosaic_0001>
module attributes {stable_mosaic.version = 11 : i64} {
  func.func @_fusion_linear_kernel(%arg0: i32, %arg1: memref<8x128xf32, #tpu.memory_space<vmem>>, %arg2: memref<128x256xf32, #tpu.memory_space<vmem>>, %arg3: memref<1x256xf32, #tpu.memory_space<vmem>>, %arg4: memref<128x256xf32, #tpu.memory_space<vmem>>, %arg5: memref<1x256xf32, #tpu.memory_space<vmem>>, %arg6: memref<8x256xf32, #tpu.memory_space<vmem>>, %arg7: memref<8x256xf32, #tpu.memory_space<vmem>>) attributes {dimension_semantics = [#tpu.dimension_semantics<parallel>], iteration_bounds = array<i64: 1>, scalar_prefetch = 0 : i64, scratch_operands = 0 : i64, tpu.core_type = #tpu.core_type<tc>, window_params = [{transform_indices = @transform_0, window_bounds = array<i64: 8, 128>}, {pipeline_mode = #tpu.pipeline_mode<synchronous>, transform_indices = @transform_1, window_bounds = array<i64: 128, 256>}, {pipeline_mode = #tpu.pipeline_mode<synchronous>, transform_indices = @transform_2, window_bounds = array<i64: 1, 256>}, {pipeline_mode = #tpu.pipeline_mode<synchronous>, transform_indices = @transform_3, window_bounds = array<i64: 128, 256>}, {pipeline_mode = #tpu.pipeline_mode<synchronous>, transform_indices = @transform_4, window_bounds = array<i64: 1, 256>}, {transform_indices = @transform_5, window_bounds = array<i64: 8, 256>}, {transform_indices = @transform_6, window_bounds = array<i64: 8, 256>}]} {
    %c0 = arith.constant 0 : index
    %c0_0 = arith.constant 0 : index
    %0 = vector.load %arg1[%c0, %c0_0] : memref<8x128xf32, #tpu.memory_space<vmem>>, vector<8x128xf32>
    %c0_1 = arith.constant 0 : index
    %c0_2 = arith.constant 0 : index
    %1 = vector.load %arg2[%c0_1, %c0_2] : memref<128x256xf32, #tpu.memory_space<vmem>>, vector<128x256xf32>
    %cst = arith.constant dense<0.000000e+00> : vector<8x256xf32>
    %2 = tpu.matmul %0, %1, %cst {dimension_numbers = #tpu.dot_dimension_numbers<[1], [0], [0], [1], [0, 0, 1, 1], [], []>} : vector<8x128xf32>, vector<128x256xf32>, vector<8x256xf32> -> vector<8x256xf32>
    %c0_3 = arith.constant 0 : index
    %c0_4 = arith.constant 0 : index
    %3 = vector.load %arg3[%c0_3, %c0_4] : memref<1x256xf32, #tpu.memory_space<vmem>>, vector<1x256xf32>
    %4 = vector.broadcast %3 : vector<1x256xf32> to vector<8x256xf32>
    %5 = arith.addf %2, %4 : vector<8x256xf32>
    %c0_5 = arith.constant 0 : index
    %c0_6 = arith.constant 0 : index
    %6 = vector.load %arg7[%c0_5, %c0_6] : memref<8x256xf32, #tpu.memory_space<vmem>>, vector<8x256xf32>
    tpu.vector_store %arg7[%c0_5, %c0_6], %5 {strides = array<i32>} : memref<8x256xf32, #tpu.memory_space<vmem>>, vector<8x256xf32>,
    %7 = vector.extract_strided_slice %5 {offsets = [0, 0], sizes = [8, 128], strides = [1, 1]} : vector<8x256xf32> to vector<8x128xf32>
    %c0_7 = arith.constant 0 : index
    %c0_8 = arith.constant 0 : index
    %8 = vector.load %arg4[%c0_7, %c0_8] : memref<128x256xf32, #tpu.memory_space<vmem>>, vector<128x256xf32>
    %cst_9 = arith.constant dense<0.000000e+00> : vector<8x256xf32>
    %9 = tpu.matmul %7, %8, %cst_9 {dimension_numbers = #tpu.dot_dimension_numbers<[1], [0], [0], [1], [0, 0, 1, 1], [], []>} : vector<8x128xf32>, vector<128x256xf32>, vector<8x256xf32> -> vector<8x256xf32>
    %c0_10 = arith.constant 0 : index
    %c0_11 = arith.constant 0 : index
    %10 = vector.load %arg5[%c0_10, %c0_11] : memref<1x256xf32, #tpu.memory_space<vmem>>, vector<1x256xf32>
    %11 = vector.broadcast %10 : vector<1x256xf32> to vector<8x256xf32>
    %12 = arith.addf %9, %11 : vector<8x256xf32>
    %c0_12 = arith.constant 0 : index
    %c0_13 = arith.constant 0 : index
    %13 = vector.load %arg6[%c0_12, %c0_13] : memref<8x256xf32, #tpu.memory_space<vmem>>, vector<8x256xf32>
    tpu.vector_store %arg6[%c0_12, %c0_13], %12 {strides = array<i32>} : memref<8x256xf32, #tpu.memory_space<vmem>>, vector<8x256xf32>,
    return
  }
  func.func @transform_0(%arg0: i32) -> (i32, i32) {
    %c0_i32 = arith.constant 0 : i32
    %c0_i32_0 = arith.constant 0 : i32
    return %arg0, %c0_i32 : i32, i32
  }
  func.func @transform_1(%arg0: i32) -> (i32, i32) {
    %c0_i32 = arith.constant 0 : i32
    %c0_i32_0 = arith.constant 0 : i32
    %c0_i32_1 = arith.constant 0 : i32
    return %c0_i32, %c0_i32_0 : i32, i32
  }
  func.func @transform_2(%arg0: i32) -> (i32, i32) {
    %c0_i32 = arith.constant 0 : i32
    %c0_i32_0 = arith.constant 0 : i32
    %c0_i32_1 = arith.constant 0 : i32
    return %c0_i32, %c0_i32_0 : i32, i32
  }
  func.func @transform_3(%arg0: i32) -> (i32, i32) {
    %c0_i32 = arith.constant 0 : i32
    %c0_i32_0 = arith.constant 0 : i32
    %c0_i32_1 = arith.constant 0 : i32
    return %c0_i32, %c0_i32_0 : i32, i32
  }
  func.func @transform_4(%arg0: i32) -> (i32, i32) {
    %c0_i32 = arith.constant 0 : i32
    %c0_i32_0 = arith.constant 0 : i32
    %c0_i32_1 = arith.constant 0 : i32
    return %c0_i32, %c0_i32_0 : i32, i32
  }
  func.func @transform_5(%arg0: i32) -> (i32, i32) {
    %c0_i32 = arith.constant 0 : i32
    %c0_i32_0 = arith.constant 0 : i32
    return %arg0, %c0_i32 : i32, i32
  }
  func.func @transform_6(%arg0: i32) -> (i32, i32) {
    %c0_i32 = arith.constant 0 : i32
    %c0_i32_0 = arith.constant 0 : i32
    return %arg0, %c0_i32 : i32, i32
  }
}

</mosaic_0001>

<llo_original>
// kernel: tpu_custom_call.1
$region0: #{tpu_custom_call.1}
  #allocation0 [shape = 'u32[]', space=smem, size = 0x4, offset = 0x4, fixed_abs, tag = 'smem constant byte address 0x4 - core index']
  #allocation1 [shape = 'u32[144,128]{1,0:T(1,128)}', space=vmem, size = 0x12000, scoped, tag = 'internal scratch']
  %s0 = inlined_call_operand.hbm [shape: f32[8,128], index: 0, kind: input, shape index: {}]
  %s1 = inlined_call_operand.hbm [shape: f32[128,256], index: 1, kind: input, shape index: {}]
  %s2 = inlined_call_operand.vmem [shape: f32[1,256], index: 2, kind: input, shape index: {}]
  %s3 = inlined_call_operand.hbm [shape: f32[128,256], index: 3, kind: input, shape index: {}]
  %s4 = inlined_call_operand.vmem [shape: f32[1,256], index: 4, kind: input, shape index: {}]
  %s5 = inlined_call_operand.hbm [shape: f32[8,256], index: 5, kind: output, shape index: {0}]
  %s6 = inlined_call_operand.hbm [shape: f32[8,256], index: 6, kind: output, shape index: {1}]
  %7 = xla_tuple %s5, %s6
  %s8 = sld [smem:[#allocation0]]
  $region50: #{tpu_custom_call.1} parent=0
    _
  %s10 = ssub.s32 1, %s8
  %s11 = scalar_select 0, %s10, %s8
  $region1: #{tpu_custom_call.1} parent=0
    #allocation2 [shape = 'u8[4096]{0}', space=vmem, size = 0x1000, scoped, tag = 'input window, operand 0, single buffered']
    #allocation3 [shape = 's32[1]{0}', space=sflag, size = 0x4, scoped, tag = 'scoped memory for tpu_custom_call.1']
    #allocation4 [shape = 's32[1]{0}', space=sflag, size = 0x4, scoped, tag = 'scoped memory for tpu_custom_call.1']
    #allocation5 [shape = 'u8[131072]{0}', space=vmem, size = 0x20000, scoped, tag = 'input window, operand 1, single buffered']
    #allocation6 [shape = 's32[1]{0}', space=sflag, size = 0x4, scoped, tag = 'scoped memory for tpu_custom_call.1']
    #allocation7 [shape = 'u8[131072]{0}', space=vmem, size = 0x20000, scoped, tag = 'input window, operand 3, single buffered']
    #allocation8 [shape = 'u8[8192]{0}', space=vmem, size = 0x2000, scoped, tag = 'output window, operand 0, single buffered']
    #allocation9 [shape = 'u8[8192]{0}', space=vmem, size = 0x2000, scoped, tag = 'output window, operand 1, single buffered']
    #allocation10 [shape = 's32[1]{0}', space=sflag, size = 0x4, scoped, tag = 'scoped memory for tpu_custom_call.1']
    %12 = vsyncpa [#allocation3], 0
    %13 = vsyncpa [#allocation6], 0
    %14 = vsyncpa [#allocation4], 0
    %15 = vsyncpa [#allocation10], 0
    // Predicated region
    $region2: #{tpu_custom_call.1} parent=1 // pred_check
      _
    $region3: #{tpu_custom_call.1} parent=1 // pred_check_branch
      %17 = sbr.rel (0) target = $region5
    $region4: #{tpu_custom_call.1} parent=1 // pred_region
      %s19 = ssub.s32 128, 128
      %20 = vsyncadd [#allocation3], %s19
      %s22 = sshll.u32 [#allocation2], 4
      %s23 = int_to_ptr.vmem [resolvable:$true] %s22
      %25 = dma.hbm_to_vmem [thread:$0]  %s0, 128, %s23, [#allocation3]
    $region5: #{tpu_custom_call.1} parent=1 // pred_fallthru
      _
    // Predicated region
    $region6: #{tpu_custom_call.1} parent=1 // pred_check
      _
    $region7: #{tpu_custom_call.1} parent=1 // pred_check_branch
      %27 = sbr.rel (0) target = $region9
    $region8: #{tpu_custom_call.1} parent=1 // pred_region
      %s29 = ssub.s32 4096, 4096
      %30 = vsyncadd [#allocation6], %s29
      %s31 = sshll.u32 [#allocation5], 4
      %s32 = int_to_ptr.vmem [resolvable:$true] %s31
      %37 = dma.hbm_to_vmem [thread:$0]  %s1, 4096, %s32, [#allocation6], 256, 256, 16
    $region9: #{tpu_custom_call.1} parent=1 // pred_fallthru
      _
    // Predicated region
    $region10: #{tpu_custom_call.1} parent=1 // pred_check
      _
    $region11: #{tpu_custom_call.1} parent=1 // pred_check_branch
      %39 = sbr.rel (0) target = $region13
    $region12: #{tpu_custom_call.1} parent=1 // pred_region
      _
    $region13: #{tpu_custom_call.1} parent=1 // pred_fallthru
      _
    // Predicated region
    $region14: #{tpu_custom_call.1} parent=1 // pred_check
      _
    $region15: #{tpu_custom_call.1} parent=1 // pred_check_branch
      %41 = sbr.rel (0) target = $region17
    $region16: #{tpu_custom_call.1} parent=1 // pred_region
      %s43 = ssub.s32 4096, 4096
      %44 = vsyncadd [#allocation6], %s43
      %s45 = sshll.u32 [#allocation7], 4
      %s46 = int_to_ptr.vmem [resolvable:$true] %s45
      %51 = dma.hbm_to_vmem [thread:$0]  %s3, 4096, %s46, [#allocation6], 256, 256, 16
    $region17: #{tpu_custom_call.1} parent=1 // pred_fallthru
      _
    // Predicated region
    $region18: #{tpu_custom_call.1} parent=1 // pred_check
      _
    $region19: #{tpu_custom_call.1} parent=1 // pred_check_branch
      %53 = sbr.rel (0) target = $region21
    $region20: #{tpu_custom_call.1} parent=1 // pred_region
      _
    $region21: #{tpu_custom_call.1} parent=1 // pred_fallthru
      _
    // Predicated region
    $region22: #{tpu_custom_call.1} parent=1 // pred_check
      _
    $region23: #{tpu_custom_call.1} parent=1 // pred_check_branch
      %55 = sbr.rel (0) target = $region25
    $region24: #{tpu_custom_call.1} parent=1 // pred_region
      %56 = dma.done [#allocation3], 128
    $region25: #{tpu_custom_call.1} parent=1 // pred_fallthru
      _
    // Predicated region
    $region26: #{tpu_custom_call.1} parent=1 // pred_check
      _
    $region27: #{tpu_custom_call.1} parent=1 // pred_check_branch
      %58 = sbr.rel (0) target = $region29
    $region28: #{tpu_custom_call.1} parent=1 // pred_region
      %59 = dma.done [#allocation6], 4096
    $region29: #{tpu_custom_call.1} parent=1 // pred_fallthru
      _
    // Predicated region
    $region30: #{tpu_custom_call.1} parent=1 // pred_check
      _
    $region31: #{tpu_custom_call.1} parent=1 // pred_check_branch
      %61 = sbr.rel (0) target = $region33
    $region32: #{tpu_custom_call.1} parent=1 // pred_region
      %62 = dma.done [#allocation6], 4096
    $region33: #{tpu_custom_call.1} parent=1 // pred_fallthru
      _
    %v63 = vld [vmem:[#allocation2] sm:$0xff]
    %v64 = vld [vmem:[#allocation5] sm:$0xff]
    %v65 = vld [vmem:[#allocation5 + $0x8] sm:$0xff]
    %v66 = vld [vmem:[#allocation5 + $0x10] sm:$0xff]
    %v67 = vld [vmem:[#allocation5 + $0x18] sm:$0xff]
    %v68 = vld [vmem:[#allocation5 + $0x20] sm:$0xff]
    %v69 = vld [vmem:[#allocation5 + $0x28] sm:$0xff]
    %v70 = vld [vmem:[#allocation5 + $0x30] sm:$0xff]
    %v71 = vld [vmem:[#allocation5 + $0x38] sm:$0xff]
    %v72 = vld [vmem:[#allocation5 + $0x40] sm:$0xff]
    %v73 = vld [vmem:[#allocation5 + $0x48] sm:$0xff]
    %v74 = vld [vmem:[#allocation5 + $0x50] sm:$0xff]
    %v75 = vld [vmem:[#allocation5 + $0x58] sm:$0xff]
    %v76 = vld [vmem:[#allocation5 + $0x60] sm:$0xff]
    %v77 = vld [vmem:[#allocation5 + $0x68] sm:$0xff]
    %v78 = vld [vmem:[#allocation5 + $0x70] sm:$0xff]
    %v79 = vld [vmem:[#allocation5 + $0x78] sm:$0xff]
    %v80 = vld [vmem:[#allocation5 + $0x80] sm:$0xff]
    %v81 = vld [vmem:[#allocation5 + $0x88] sm:$0xff]
    %v82 = vld [vmem:[#allocation5 + $0x90] sm:$0xff]
    %v83 = vld [vmem:[#allocation5 + $0x98] sm:$0xff]
    %v84 = vld [vmem:[#allocation5 + $0xa0] sm:$0xff]
    %v85 = vld [vmem:[#allocation5 + $0xa8] sm:$0xff]
    %v86 = vld [vmem:[#allocation5 + $0xb0] sm:$0xff]
    %v87 = vld [vmem:[#allocation5 + $0xb8] sm:$0xff]
    %v88 = vld [vmem:[#allocation5 + $0xc0] sm:$0xff]
    %v89 = vld [vmem:[#allocation5 + $0xc8] sm:$0xff]
    %v90 = vld [vmem:[#allocation5 + $0xd0] sm:$0xff]
    %v91 = vld [vmem:[#allocation5 + $0xd8] sm:$0xff]
    %v92 = vld [vmem:[#allocation5 + $0xe0] sm:$0xff]
    %v93 = vld [vmem:[#allocation5 + $0xe8] sm:$0xff]
    %v94 = vld [vmem:[#allocation5 + $0xf0] sm:$0xff]
    %v95 = vld [vmem:[#allocation5 + $0xf8] sm:$0xff]
    %v96 = vld [vmem:[%s2] sm:$0x3]
    %v98 = vlaneseq
    %v99 = vshrl.u32 %v98, 7
    %v100 = vsub.s32 0, %v99
    %v101 = vrot.slane %v96, %v100
    %v102 = vlaneseq
    %v103 = vshrl.u32 %v102, 7
    %v104 = vsub.s32 1, %v103
    %v105 = vrot.slane %v96, %v104
    %108 = vmatprep.subr.mxu0 %v95
    %109 = vmatpush1.msra.mxu0 %v94
    %110 = vmatprep.subr.mxu0 %v93
    %111 = vmatpush1.msra.mxu0 %v92
    %112 = vmatprep.subr.mxu0 %v91
    %113 = vmatpush1.msra.mxu0 %v90
    %114 = vmatprep.subr.mxu0 %v89
    %115 = vmatpush1.msra.mxu0 %v88
    %116 = vmatprep.subr.mxu0 %v87
    %117 = vmatpush1.msra.mxu0 %v86
    %118 = vmatprep.subr.mxu0 %v85
    %119 = vmatpush1.msra.mxu0 %v84
    %120 = vmatprep.subr.mxu0 %v83
    %121 = vmatpush1.msra.mxu0 %v82
    %122 = vmatprep.subr.mxu0 %v81
    %123 = vmatpush1.msra.mxu0 %v80
    %124 = vmatprep.subr.mxu0 %v79
    %125 = vmatpush1.msra.mxu0 %v78
    %126 = vmatprep.subr.mxu0 %v77
    %127 = vmatpush1.msra.mxu0 %v76
    %128 = vmatprep.subr.mxu0 %v75
    %129 = vmatpush1.msra.mxu0 %v74
    %130 = vmatprep.subr.mxu0 %v73
    %131 = vmatpush1.msra.mxu0 %v72
    %132 = vmatprep.subr.mxu0 %v71
    %133 = vmatpush1.msra.mxu0 %v70
    %134 = vmatprep.subr.mxu0 %v69
    %135 = vmatpush1.msra.mxu0 %v68
    %136 = vmatprep.subr.mxu0 %v67
    %137 = vmatpush1.msra.mxu0 %v66
    %138 = vmatprep.subr.mxu0 %v65
    %139 = vmatpush1.msra.mxu0 %v64
    %140 = vmatprep.subr.mxu0 0.0
    %141 = vmatpush2.msra.mxu0 0.0
    %142 = vmatprep.subr.mxu0 0.0
    %143 = vmatpush2.msra.mxu0 0.0
    %144 = vmatprep.subr.mxu0 0.0
    %145 = vmatpush2.msra.mxu0 0.0
    %146 = vmatprep.subr.mxu0 0.0
    %147 = vmatpush2.msra.mxu0 0.0
    %148 = vmatprep.subr.mxu0 0.0
    %149 = vmatpush2.msra.mxu0 0.0
    %150 = vmatprep.subr.mxu0 0.0
    %151 = vmatpush2.msra.mxu0 0.0
    %152 = vmatprep.subr.mxu0 0.0
    %153 = vmatpush2.msra.mxu0 0.0
    %154 = vmatprep.subr.mxu0 0.0
    %155 = vmatpush2.msra.mxu0 0.0
    %156 = vmatprep.subr.mxu0 0.0
    %157 = vmatpush2.msra.mxu0 0.0
    %158 = vmatprep.subr.mxu0 0.0
    %159 = vmatpush2.msra.mxu0 0.0
    %160 = vmatprep.subr.mxu0 0.0
    %161 = vmatpush2.msra.mxu0 0.0
    %162 = vmatprep.subr.mxu0 0.0
    %163 = vmatpush2.msra.mxu0 0.0
    %164 = vmatprep.subr.mxu0 0.0
    %165 = vmatpush2.msra.mxu0 0.0
    %166 = vmatprep.subr.mxu0 0.0
    %167 = vmatpush2.msra.mxu0 0.0
    %168 = vmatprep.subr.mxu0 0.0
    %169 = vmatpush2.msra.mxu0 0.0
    %170 = vmatprep.subr.mxu0 0.0
    %171 = vmatpush2.msra.mxu0 0.0
    %172 = vmatprep.mubr.f32.mxu0 0.0
    %173 = vmatmul.mubr.f32.gmra.mxu0 %v63
    %v174 = vpop.f32.mrf.mxu0
    %v175 = vadd.f32 %v101, %v174
    %v176 = vpop.f32.mrf.mxu0
    %v177 = vadd.f32 %v105, %v176
    %178 = vdwg.mxu0
    %179 = vst [vmem:[#allocation9] sm:$0xff] %v175
    %180 = vst [vmem:[#allocation9 + $0x8] sm:$0xff] %v177
    %v181 = vld [vmem:[#allocation7] sm:$0xff]
    %v182 = vld [vmem:[#allocation7 + $0x8] sm:$0xff]
    %v183 = vld [vmem:[#allocation7 + $0x10] sm:$0xff]
    %v184 = vld [vmem:[#allocation7 + $0x18] sm:$0xff]
    %v185 = vld [vmem:[#allocation7 + $0x20] sm:$0xff]
    %v186 = vld [vmem:[#allocation7 + $0x28] sm:$0xff]
    %v187 = vld [vmem:[#allocation7 + $0x30] sm:$0xff]
    %v188 = vld [vmem:[#allocation7 + $0x38] sm:$0xff]
    %v189 = vld [vmem:[#allocation7 + $0x40] sm:$0xff]
    %v190 = vld [vmem:[#allocation7 + $0x48] sm:$0xff]
    %v191 = vld [vmem:[#allocation7 + $0x50] sm:$0xff]
    %v192 = vld [vmem:[#allocation7 + $0x58] sm:$0xff]
    %v193 = vld [vmem:[#allocation7 + $0x60] sm:$0xff]
    %v194 = vld [vmem:[#allocation7 + $0x68] sm:$0xff]
    %v195 = vld [vmem:[#allocation7 + $0x70] sm:$0xff]
    %v196 = vld [vmem:[#allocation7 + $0x78] sm:$0xff]
    %v197 = vld [vmem:[#allocation7 + $0x80] sm:$0xff]
    %v198 = vld [vmem:[#allocation7 + $0x88] sm:$0xff]
    %v199 = vld [vmem:[#allocation7 + $0x90] sm:$0xff]
    %v200 = vld [vmem:[#allocation7 + $0x98] sm:$0xff]
    %v201 = vld [vmem:[#allocation7 + $0xa0] sm:$0xff]
    %v202 = vld [vmem:[#allocation7 + $0xa8] sm:$0xff]
    %v203 = vld [vmem:[#allocation7 + $0xb0] sm:$0xff]
    %v204 = vld [vmem:[#allocation7 + $0xb8] sm:$0xff]
    %v205 = vld [vmem:[#allocation7 + $0xc0] sm:$0xff]
    %v206 = vld [vmem:[#allocation7 + $0xc8] sm:$0xff]
    %v207 = vld [vmem:[#allocation7 + $0xd0] sm:$0xff]
    %v208 = vld [vmem:[#allocation7 + $0xd8] sm:$0xff]
    %v209 = vld [vmem:[#allocation7 + $0xe0] sm:$0xff]
    %v210 = vld [vmem:[#allocation7 + $0xe8] sm:$0xff]
    %v211 = vld [vmem:[#allocation7 + $0xf0] sm:$0xff]
    %v212 = vld [vmem:[#allocation7 + $0xf8] sm:$0xff]
    %v213 = vld [vmem:[%s4] sm:$0x3]
    %v215 = vlaneseq
    %v216 = vshrl.u32 %v215, 7
    %v217 = vsub.s32 0, %v216
    %v218 = vrot.slane %v213, %v217
    %v219 = vlaneseq
    %v220 = vshrl.u32 %v219, 7
    %v221 = vsub.s32 1, %v220
    %v222 = vrot.slane %v213, %v221
    %225 = vmatprep.subr.mxu0 %v212
    %226 = vmatpush1.msra.mxu0 %v211
    %227 = vmatprep.subr.mxu0 %v210
    %228 = vmatpush1.msra.mxu0 %v209
    %229 = vmatprep.subr.mxu0 %v208
    %230 = vmatpush1.msra.mxu0 %v207
    %231 = vmatprep.subr.mxu0 %v206
    %232 = vmatpush1.msra.mxu0 %v205
    %233 = vmatprep.subr.mxu0 %v204
    %234 = vmatpush1.msra.mxu0 %v203
    %235 = vmatprep.subr.mxu0 %v202
    %236 = vmatpush1.msra.mxu0 %v201
    %237 = vmatprep.subr.mxu0 %v200
    %238 = vmatpush1.msra.mxu0 %v199
    %239 = vmatprep.subr.mxu0 %v198
    %240 = vmatpush1.msra.mxu0 %v197
    %241 = vmatprep.subr.mxu0 %v196
    %242 = vmatpush1.msra.mxu0 %v195
    %243 = vmatprep.subr.mxu0 %v194
    %244 = vmatpush1.msra.mxu0 %v193
    %245 = vmatprep.subr.mxu0 %v192
    %246 = vmatpush1.msra.mxu0 %v191
    %247 = vmatprep.subr.mxu0 %v190
    %248 = vmatpush1.msra.mxu0 %v189
    %249 = vmatprep.subr.mxu0 %v188
    %250 = vmatpush1.msra.mxu0 %v187
    %251 = vmatprep.subr.mxu0 %v186
    %252 = vmatpush1.msra.mxu0 %v185
    %253 = vmatprep.subr.mxu0 %v184
    %254 = vmatpush1.msra.mxu0 %v183
    %255 = vmatprep.subr.mxu0 %v182
    %256 = vmatpush1.msra.mxu0 %v181
    %257 = vmatprep.subr.mxu0 0.0
    %258 = vmatpush2.msra.mxu0 0.0
    %259 = vmatprep.subr.mxu0 0.0
    %260 = vmatpush2.msra.mxu0 0.0
    %261 = vmatprep.subr.mxu0 0.0
    %262 = vmatpush2.msra.mxu0 0.0
    %263 = vmatprep.subr.mxu0 0.0
    %264 = vmatpush2.msra.mxu0 0.0
    %265 = vmatprep.subr.mxu0 0.0
    %266 = vmatpush2.msra.mxu0 0.0
    %267 = vmatprep.subr.mxu0 0.0
    %268 = vmatpush2.msra.mxu0 0.0
    %269 = vmatprep.subr.mxu0 0.0
    %270 = vmatpush2.msra.mxu0 0.0
    %271 = vmatprep.subr.mxu0 0.0
    %272 = vmatpush2.msra.mxu0 0.0
    %273 = vmatprep.subr.mxu0 0.0
    %274 = vmatpush2.msra.mxu0 0.0
    %275 = vmatprep.subr.mxu0 0.0
    %276 = vmatpush2.msra.mxu0 0.0
    %277 = vmatprep.subr.mxu0 0.0
    %278 = vmatpush2.msra.mxu0 0.0
    %279 = vmatprep.subr.mxu0 0.0
    %280 = vmatpush2.msra.mxu0 0.0
    %281 = vmatprep.subr.mxu0 0.0
    %282 = vmatpush2.msra.mxu0 0.0
    %283 = vmatprep.subr.mxu0 0.0
    %284 = vmatpush2.msra.mxu0 0.0
    %285 = vmatprep.subr.mxu0 0.0
    %286 = vmatpush2.msra.mxu0 0.0
    %287 = vmatprep.subr.mxu0 0.0
    %288 = vmatpush2.msra.mxu0 0.0
    %289 = vmatprep.mubr.f32.mxu0 0.0
    %290 = vmatmul.mubr.f32.gmra.mxu0 %v175
    %v291 = vpop.f32.mrf.mxu0
    %v292 = vadd.f32 %v218, %v291
    %v293 = vpop.f32.mrf.mxu0
    %v294 = vadd.f32 %v222, %v293
    %295 = vdwg.mxu0
    %296 = vst [vmem:[#allocation8] sm:$0xff] %v292
    %297 = vst [vmem:[#allocation8 + $0x8] sm:$0xff] %v294
    // Predicated region
    $region34: #{tpu_custom_call.1} parent=1 // pred_check
      _
    $region35: #{tpu_custom_call.1} parent=1 // pred_check_branch
      %299 = sbr.rel (0) target = $region37
    $region36: #{tpu_custom_call.1} parent=1 // pred_region
      %s301 = ssub.s32 256, 256
      %302 = vsyncadd [#allocation4], %s301
      %s304 = sshll.u32 [#allocation8], 4
      %s305 = int_to_ptr.vmem [resolvable:$true] %s304
      %307 = dma.vmem_to_hbm [thread:$0]  %s305, 256, %s5, [#allocation4]
    $region37: #{tpu_custom_call.1} parent=1 // pred_fallthru
      _
    // Predicated region
    $region38: #{tpu_custom_call.1} parent=1 // pred_check
      _
    $region39: #{tpu_custom_call.1} parent=1 // pred_check_branch
      %309 = sbr.rel (0) target = $region41
    $region40: #{tpu_custom_call.1} parent=1 // pred_region
      %s311 = ssub.s32 256, 256
      %312 = vsyncadd [#allocation10], %s311
      %s314 = sshll.u32 [#allocation9], 4
      %s315 = int_to_ptr.vmem [resolvable:$true] %s314
      %317 = dma.vmem_to_hbm [thread:$0]  %s315, 256, %s6, [#allocation10]
    $region41: #{tpu_custom_call.1} parent=1 // pred_fallthru
      _
    // Predicated region
    $region42: #{tpu_custom_call.1} parent=1 // pred_check
      _
    $region43: #{tpu_custom_call.1} parent=1 // pred_check_branch
      %319 = sbr.rel (0) target = $region45
    $region44: #{tpu_custom_call.1} parent=1 // pred_region
      %320 = dma.done [#allocation4], 256
    $region45: #{tpu_custom_call.1} parent=1 // pred_fallthru
      _
    // Predicated region
    $region46: #{tpu_custom_call.1} parent=1 // pred_check
      _
    $region47: #{tpu_custom_call.1} parent=1 // pred_check_branch
      %322 = sbr.rel (0) target = $region49
    $region48: #{tpu_custom_call.1} parent=1 // pred_region
      %323 = dma.done [#allocation10], 256
    $region49: #{tpu_custom_call.1} parent=1 // pred_fallthru
      _
    %324 = vsyncpa [#allocation3], 1
    %325 = vsyncpa [#allocation6], 1
    %326 = vsyncpa [#allocation4], 1
    %327 = vsyncpa [#allocation10], 1

</llo_original>
